<compile_context>
chip_gen: v7x
topology: tpu7x:2x2x1
jax: 0.10.0
libtpu: 0.0.40
codegen_flags: <defaults>
</compile_context>

<pallas_src>
import jax
import jax.numpy as jnp
from jax import lax
from jax.experimental import pallas as pl
from jax.experimental.pallas import tpu as pltpu


_LANE = 128
_SUBLANE = 8
_VMEM_LIMIT = 32 * 1024 * 1024  # scoped-VMEM limit, safe on v5e/v6e/v7x


def _round_up(x, m):
    return ((x + m - 1) // m) * m


# ----------------------------------------------------------------------------
# Tile selection helpers.
# ----------------------------------------------------------------------------
def _pick_n_tiling(cout):
    """Output-channel tile. Wide (>=256) tiles fill the 256-wide MXU on v6e/v7x
    and cut A-tile HBM re-reads by coutp/tn."""
    coutp = _round_up(cout, _LANE)
    if coutp <= 512:
        return coutp, coutp          # single lane-dense block, unmasked stores
    for tn in (512, 384, 256, 128):
        if coutp % tn == 0:
            return tn, coutp
    return _LANE, coutp


def _pick_m_tiling(m):
    """Row tile chosen to minimize zero-padding of M (avoid ~2x wasted MXU work)."""
    m8 = _round_up(max(m, 1), _SUBLANE)
    if m8 <= 512:
        return m8, m8
    best_tm, best_mp = None, None
    for tm in (512, 384, 256):       # all multiples of 16 (bf16 sublane packing)
        mp = _round_up(m8, tm)
        if best_mp is None or mp < best_mp or (mp == best_mp and tm > best_tm):
            best_tm, best_mp = tm, mp
    return best_tm, best_mp


def _pick_k_tiling(k):
    if k <= 512:
        return k, k
    best_tk, best_kp = None, None
    for tk in (512, 384, 256):
        kp = _round_up(k, tk)
        if best_kp is None or kp < best_kp or (kp == best_kp and tk > best_tk):
            best_tk, best_kp = tk, kp
    return best_tk, best_kp


def _maybe_split_for_two_cores(tm, mp, n_j):
    """v7x has 2 TensorCores: make sure the parallel part of the grid has >=2 steps."""
    if (mp // tm) * n_j >= 2:
        return tm
    if mp % 32 == 0 and mp >= 32:    # halves stay multiples of 16 for bf16 blocks
        return mp // 2
    return tm


def _pick_affine_tiles(mp, coutp, tm_gemm):
    """Big mem-bound tiles for the affine pass (decoupled from GEMM tm), with a
    lane tile so blocks fit v7x's 64 MiB physical / 32 MiB scoped VMEM."""
    tn_aff = coutp
    if coutp > 2048:
        for t in (2048, 1024, 512, 256, 128):
            if coutp % t == 0:
                tn_aff = t
                break
    n_m_blocks = mp // tm_gemm
    # keep >=2 total grid steps when possible so both v7x TCs get work
    max_mult = n_m_blocks if (coutp // tn_aff) >= 2 else max(1, n_m_blocks // 2)
    budget = 12 * 1024 * 1024        # bf16 in + f32 out, double buffered
    rows_cap = max(tm_gemm, budget // (tn_aff * (2 + 4) * 2))
    max_mult = min(max_mult, max(1, 2048 // tm_gemm), max(1, rows_cap // tm_gemm))
    tm_aff = tm_gemm
    for mult in range(max_mult, 0, -1):
        if n_m_blocks % mult == 0:
            tm_aff = tm_gemm * mult
            break
    return tm_aff, tn_aff


# ----------------------------------------------------------------------------
# Kernel 1: conv-as-matmul (im2col GEMM) with fused per-column batch statistics.
#   - y written once in bf16 (f32 accumulator kept for the stats)
#   - per-(i,j) partial sum / sumsq emitted as small f32 outputs (8 replicated
#     sublanes so every block obeys the (8,128) tiling rule); reduced in JAX.
# ----------------------------------------------------------------------------
def _gemm_stats_kernel(a_ref, b_ref, o_ref, sum_ref, sq_ref):
    # Single-K variant: no accumulator scratch needed.
    acc = jnp.dot(a_ref[...], b_ref[...], preferred_element_type=jnp.float32)
    o_ref[...] = acc.astype(o_ref.dtype)
    ps = jnp.sum(acc, axis=0, keepdims=True)
    qs = jnp.sum(acc * acc, axis=0, keepdims=True)
    sum_ref[...] = jnp.broadcast_to(ps, sum_ref.shape)
    sq_ref[...] = jnp.broadcast_to(qs, sq_ref.shape)


def _gemm_stats_acc_kernel(a_ref, b_ref, o_ref, sum_ref, sq_ref, acc_ref):
    @pl.when(pl.program_id(2) == 0)
    def _():
        acc_ref[...] = jnp.zeros_like(acc_ref)

    acc_ref[...] += jnp.dot(a_ref[...], b_ref[...],
                            preferred_element_type=jnp.float32)

    @pl.when(pl.program_id(2) == pl.num_programs(2) - 1)
    def _():
        acc = acc_ref[...]
        o_ref[...] = acc.astype(o_ref.dtype)
        ps = jnp.sum(acc, axis=0, keepdims=True)
        qs = jnp.sum(acc * acc, axis=0, keepdims=True)
        sum_ref[...] = jnp.broadcast_to(ps, sum_ref.shape)
        sq_ref[...] = jnp.broadcast_to(qs, sq_ref.shape)


def conv_gemm_stats(a, b, m, k, cout):
    """a: (M, K) bf16 im2col, b: (K, Cout) bf16.
    Returns (y_pad bf16 (Mp, Coutp), partial sums, partial sumsqs, Mp, Coutp, tm)."""
    tn, coutp = _pick_n_tiling(cout)
    tm, mp = _pick_m_tiling(m)
    tk, kp = _pick_k_tiling(k)
    tm = _maybe_split_for_two_cores(tm, mp, coutp // tn)
    nk = kp // tk
    n_i = mp // tm

    if (mp, kp) != (m, k):
        a = jnp.pad(a, ((0, mp - m), (0, kp - k)))
    if (kp, coutp) != (k, cout):
        b = jnp.pad(b, ((0, kp - k), (0, coutp - cout)))

    kernel = _gemm_stats_acc_kernel if nk > 1 else _gemm_stats_kernel
    scratch = [pltpu.VMEM((tm, tn), jnp.float32)] if nk > 1 else []

    y, sums, sqs = pl.pallas_call(
        kernel,
        out_shape=(jax.ShapeDtypeStruct((mp, coutp), jnp.bfloat16),
                   jax.ShapeDtypeStruct((n_i * _SUBLANE, coutp), jnp.float32),
                   jax.ShapeDtypeStruct((n_i * _SUBLANE, coutp), jnp.float32)),
        grid_spec=pltpu.PrefetchScalarGridSpec(
            num_scalar_prefetch=0,
            grid=(n_i, coutp // tn, nk),
            in_specs=[
                pl.BlockSpec((tm, tk), lambda i, j, l: (i, l)),
                pl.BlockSpec((tk, tn), lambda i, j, l: (l, j)),
            ],
            out_specs=(
                pl.BlockSpec((tm, tn), lambda i, j, l: (i, j)),
                pl.BlockSpec((_SUBLANE, tn), lambda i, j, l: (i, j)),
                pl.BlockSpec((_SUBLANE, tn), lambda i, j, l: (i, j)),
            ),
            scratch_shapes=scratch),
        compiler_params=pltpu.CompilerParams(
            dimension_semantics=("parallel", "parallel", "arbitrary"),
            vmem_limit_bytes=_VMEM_LIMIT),
    )(a, b)
    return y, sums, sqs, mp, coutp, tm


# ----------------------------------------------------------------------------
# Kernel 2: fused affine (folded BN scale/shift) + ReLU.
# Reads bf16 y, computes in f32, writes f32 once.
# ----------------------------------------------------------------------------
def _affine_relu_kernel(y_ref, scale_ref, shift_ref, o_ref):
    y = y_ref[...].astype(jnp.float32)
    o_ref[...] = jnp.maximum(y * scale_ref[...] + shift_ref[...], 0.0)


def affine_relu(y_pad, scale, shift, tm_gemm):
    mp, coutp = y_pad.shape
    tm, tn = _pick_affine_tiles(mp, coutp, tm_gemm)
    return pl.pallas_call(
        _affine_relu_kernel,
        out_shape=jax.ShapeDtypeStruct((mp, coutp), jnp.float32),
        grid_spec=pltpu.PrefetchScalarGridSpec(
            num_scalar_prefetch=0,
            grid=(mp // tm, coutp // tn),
            in_specs=[
                pl.BlockSpec((tm, tn), lambda i, j: (i, j)),
                pl.BlockSpec((1, tn), lambda i, j: (0, j)),
                pl.BlockSpec((1, tn), lambda i, j: (0, j)),
            ],
            out_specs=pl.BlockSpec((tm, tn), lambda i, j: (i, j))),
        compiler_params=pltpu.CompilerParams(
            dimension_semantics=("parallel", "parallel"),
            vmem_limit_bytes=_VMEM_LIMIT),
    )(y_pad, scale, shift)


# ----------------------------------------------------------------------------
# Glue: bf16 NHWC im2col (no big transpose; the patch matrix is materialized
# directly in its GEMM layout and in bf16 -> half the pre-GEMM HBM traffic).
# TODO(synk): replace materialized im2col with an implicit-GEMM Pallas kernel
#             (halo'd NHWC input tiles + kh*kw shifted dot-accumulates) to avoid
#             the kh*kw redundancy written/re-read through HBM.
# ----------------------------------------------------------------------------
def im2col_bf16(x, kh, kw, stride, padding):
    n, c, h, w = x.shape
    ho = (h + 2 * padding - kh) // stride + 1
    wo = (w + 2 * padding - kw) // stride + 1
    x_nhwc = jnp.transpose(x, (0, 2, 3, 1)).astype(jnp.bfloat16)
    xp = jnp.pad(x_nhwc, ((0, 0), (padding, padding), (padding, padding), (0, 0)))
    patches = []
    for i in range(kh):
        for j in range(kw):
            patches.append(xp[:, i:i + stride * ho:stride, j:j + stride * wo:stride, :])
    x_col = jnp.stack(patches, axis=3)              # (N, Ho, Wo, kh*kw, C) bf16
    x_col = x_col.reshape(n * ho * wo, kh * kw * c)  # view-like reshape, no transpose
    return x_col, ho, wo


def conv2d_relu(x, weight, gamma, beta, *, stride=1, padding=0, eps=1e-5):
    """Conv2d(no bias) -> BatchNorm2d(biased batch stats, training mode) -> ReLU. x: NCHW f32."""
    n, cin, h, w = x.shape
    cout, _, kh, kw = weight.shape

    x_col, ho, wo = im2col_bf16(x, kh, kw, stride, padding)       # (M, K) bf16
    m_rows, k_dim = x_col.shape
    # Weight in matching (kh, kw, Cin) -> Cout layout (tiny array, free).
    w_col = jnp.transpose(weight, (2, 3, 1, 0)).reshape(k_dim, cout).astype(jnp.bfloat16)

    # Pass 1: GEMM with fused per-column batch statistics (padded rows/cols are 0).
    y_pad, sums, sqs, mp, coutp, tm = conv_gemm_stats(x_col, w_col, m_rows, k_dim, cout)

    # Tiny JAX reduction of the per-block partials (each replicated over 8 sublanes).
    sum_c = jnp.sum(sums, axis=0, keepdims=True) * (1.0 / _SUBLANE)   # (1, Coutp)
    sq_c = jnp.sum(sqs, axis=0, keepdims=True) * (1.0 / _SUBLANE)
    inv_m = 1.0 / float(m_rows)
    mean = sum_c * inv_m
    var = jnp.maximum(sq_c * inv_m - mean * mean, 0.0)                # biased, torch train-mode
    inv_std = lax.rsqrt(var + eps)

    gamma_p = jnp.pad(gamma.astype(jnp.float32), (0, coutp - cout)).reshape(1, coutp)
    beta_p = jnp.pad(beta.astype(jnp.float32), (0, coutp - cout)).reshape(1, coutp)
    scale = gamma_p * inv_std
    shift = beta_p - mean * scale

    # Pass 2: fused affine (BN) + ReLU, written once in f32.
    out = affine_relu(y_pad, scale, shift, tm)                        # (Mp, Coutp)

    # TODO(synk): keep NHWC for NHWC-consuming downstream layers; the final
    # transpose below is an extra HBM pass kept only to match the PyTorch layout.
    out = out[:m_rows, :cout].reshape(n, ho, wo, cout).transpose(0, 3, 1, 2)
    return out


# ----------------------------------------------------------------------------
# Reference (pure JAX) for a sanity check.
# ----------------------------------------------------------------------------
def conv2d_relu_ref(x, weight, gamma, beta, *, stride=1, padding=0, eps=1e-5):
    y = lax.conv_general_dilated(
        x, weight, window_strides=(stride, stride),
        padding=[(padding, padding), (padding, padding)],
        dimension_numbers=("NCHW", "OIHW", "NCHW"))
    mean = y.mean(axis=(0, 2, 3), keepdims=True)
    var = ((y - mean) ** 2).mean(axis=(0, 2, 3), keepdims=True)   # biased, like torch train-mode
    yhat = (y - mean) * lax.rsqrt(var + eps) * gamma.reshape(1, -1, 1, 1) + beta.reshape(1, -1, 1, 1)
    return jnp.maximum(yhat, 0.0)


if __name__ == "__main__":
    key = jax.random.PRNGKey(0)
    k_x, k_w = jax.random.split(key)

    N, Cin, H, W = 2, 4, 16, 16
    Cout, ksize, padding, stride = 8, 3, 1, 1

    x = jax.random.normal(k_x, (N, Cin, H, W), dtype=jnp.float32)
    # Conv weight: deterministic random (stand-in for torch's kaiming init); no bias
    # because use_batchnorm=True.
    weight = 0.1 * jax.random.normal(k_w, (Cout, Cin, ksize, ksize), dtype=jnp.float32)
    # BatchNorm2d affine params, PyTorch default init: gamma=1, beta=0.
    gamma = jnp.ones((Cout,), dtype=jnp.float32)
    beta = jnp.zeros((Cout,), dtype=jnp.float32)

    out = conv2d_relu(x, weight, gamma, beta, stride=stride, padding=padding)
    out = jax.block_until_ready(out)

    ref = conv2d_relu_ref(x, weight, gamma, beta, stride=stride, padding=padding)
    assert out.shape == (N, Cout, H, W), out.shape
    # bf16 GEMM operands + bf16 y storage (f32 accumulation/stats) -> slightly
    # looser tolerance than a pure-f32 pipeline.
    assert jnp.allclose(out, ref, atol=3e-2, rtol=3e-2), float(jnp.max(jnp.abs(out - ref)))

    print("KERNEL_OK")
</pallas_src>

<mosaic_0001>
module attributes {stable_mosaic.version = 11 : i64} {
  func.func @_gemm_stats_kernel(%arg0: i32, %arg1: i32, %arg2: i32, %arg3: memref<256x36xbf16, #tpu.memory_space<vmem>>, %arg4: memref<36x128xbf16, #tpu.memory_space<vmem>>, %arg5: memref<256x128xbf16, #tpu.memory_space<vmem>>, %arg6: memref<8x128xf32, #tpu.memory_space<vmem>>, %arg7: memref<8x128xf32, #tpu.memory_space<vmem>>) attributes {dimension_semantics = [#tpu.dimension_semantics<parallel>, #tpu.dimension_semantics<parallel>, #tpu.dimension_semantics<arbitrary>], iteration_bounds = array<i64: 2, 1, 1>, scalar_prefetch = 0 : i64, scratch_operands = 0 : i64, tpu.core_type = #tpu.core_type<tc>, window_params = [{transform_indices = @transform_0, window_bounds = array<i64: 256, 36>}, {transform_indices = @transform_1, window_bounds = array<i64: 36, 128>}, {transform_indices = @transform_2, window_bounds = array<i64: 256, 128>}, {transform_indices = @transform_3, window_bounds = array<i64: 8, 128>}, {transform_indices = @transform_4, window_bounds = array<i64: 8, 128>}]} {
    %c0 = arith.constant 0 : index
    %c0_0 = arith.constant 0 : index
    %0 = vector.load %arg3[%c0, %c0_0] : memref<256x36xbf16, #tpu.memory_space<vmem>>, vector<256x36xbf16>
    %c0_1 = arith.constant 0 : index
    %c0_2 = arith.constant 0 : index
    %1 = vector.load %arg4[%c0_1, %c0_2] : memref<36x128xbf16, #tpu.memory_space<vmem>>, vector<36x128xbf16>
    %cst = arith.constant dense<0.000000e+00> : vector<256x128xf32>
    %2 = tpu.matmul %0, %1, %cst {dimension_numbers = #tpu.dot_dimension_numbers<[1], [0], [0], [1], [0, 0, 1, 1], [], []>} : vector<256x36xbf16>, vector<36x128xbf16>, vector<256x128xf32> -> vector<256x128xf32>
    %3 = arith.truncf %2 : vector<256x128xf32> to vector<256x128xbf16>
    %c0_3 = arith.constant 0 : index
    %c0_4 = arith.constant 0 : index
    %4 = vector.load %arg5[%c0_3, %c0_4] : memref<256x128xbf16, #tpu.memory_space<vmem>>, vector<256x128xbf16>
    tpu.vector_store %arg5[%c0_3, %c0_4], %3 {strides = array<i32>} : memref<256x128xbf16, #tpu.memory_space<vmem>>, vector<256x128xbf16>,
    %cst_5 = arith.constant dense<0.000000e+00> : vector<128xf32>
    %5 = vector.multi_reduction <add>, %2, %cst_5 [0] : vector<256x128xf32> to vector<128xf32>
    %6 = vector.shape_cast %5 : vector<128xf32> to vector<1x128xf32>
    %7 = arith.mulf %2, %2 : vector<256x128xf32>
    %cst_6 = arith.constant dense<0.000000e+00> : vector<128xf32>
    %8 = vector.multi_reduction <add>, %7, %cst_6 [0] : vector<256x128xf32> to vector<128xf32>
    %9 = vector.shape_cast %8 : vector<128xf32> to vector<1x128xf32>
    %10 = vector.shape_cast %6 : vector<1x128xf32> to vector<1x128xf32>
    %11 = vector.broadcast %10 : vector<1x128xf32> to vector<8x128xf32>
    %c0_7 = arith.constant 0 : index
    %c0_8 = arith.constant 0 : index
    %12 = vector.load %arg6[%c0_7, %c0_8] : memref<8x128xf32, #tpu.memory_space<vmem>>, vector<8x128xf32>
    tpu.vector_store %arg6[%c0_7, %c0_8], %11 {strides = array<i32>} : memref<8x128xf32, #tpu.memory_space<vmem>>, vector<8x128xf32>,
    %13 = vector.shape_cast %9 : vector<1x128xf32> to vector<1x128xf32>
    %14 = vector.broadcast %13 : vector<1x128xf32> to vector<8x128xf32>
    %c0_9 = arith.constant 0 : index
    %c0_10 = arith.constant 0 : index
    %15 = vector.load %arg7[%c0_9, %c0_10] : memref<8x128xf32, #tpu.memory_space<vmem>>, vector<8x128xf32>
    tpu.vector_store %arg7[%c0_9, %c0_10], %14 {strides = array<i32>} : memref<8x128xf32, #tpu.memory_space<vmem>>, vector<8x128xf32>,
    return
  }
  func.func @transform_0(%arg0: i32, %arg1: i32, %arg2: i32) -> (i32, i32) {
    %c0_i32 = arith.constant 0 : i32
    return %arg0, %arg2 : i32, i32
  }
  func.func @transform_1(%arg0: i32, %arg1: i32, %arg2: i32) -> (i32, i32) {
    %c0_i32 = arith.constant 0 : i32
    return %arg2, %arg1 : i32, i32
  }
  func.func @transform_2(%arg0: i32, %arg1: i32, %arg2: i32) -> (i32, i32) {
    %c0_i32 = arith.constant 0 : i32
    return %arg0, %arg1 : i32, i32
  }
  func.func @transform_3(%arg0: i32, %arg1: i32, %arg2: i32) -> (i32, i32) {
    %c0_i32 = arith.constant 0 : i32
    return %arg0, %arg1 : i32, i32
  }
  func.func @transform_4(%arg0: i32, %arg1: i32, %arg2: i32) -> (i32, i32) {
    %c0_i32 = arith.constant 0 : i32
    return %arg0, %arg1 : i32, i32
  }
}

</mosaic_0001>

<llo_original>
// kernel: tpu_custom_call.1
$region0: #{tpu_custom_call.1}
  #allocation0 [shape = 'u32[]', space=smem, size = 0x4, offset = 0x4, fixed_abs, tag = 'smem constant byte address 0x4 - core index']
  #allocation1 [shape = 'u32[144,128]{1,0:T(1,128)}', space=vmem, size = 0x12000, scoped, tag = 'internal scratch']
  %s0 = inlined_call_operand.vmem [shape: bf16[512,36], index: 0, kind: input, shape index: {}]
  %s1 = inlined_call_operand.vmem [shape: bf16[36,128], index: 1, kind: input, shape index: {}]
  %s2 = inlined_call_operand.hbm [shape: bf16[512,128], index: 2, kind: output, shape index: {0}]
  %s3 = inlined_call_operand.hbm [shape: f32[16,128], index: 3, kind: output, shape index: {1}]
  %s4 = inlined_call_operand.hbm [shape: f32[16,128], index: 4, kind: output, shape index: {2}]
  %5 = xla_tuple %s2, %s3, %s4
  %s6 = sld [smem:[#allocation0]]
  $region57: #{tpu_custom_call.1} parent=0
    _
  %s8 = ssub.s32 1, %s6
  %s9 = scalar_select 0, %s8, %s6
  $region1: #{tpu_custom_call.1} parent=0
    #allocation2 [shape = 'u8[131072]{0}', space=vmem, size = 0x20000, scoped, tag = 'output window, operand 0']
    #allocation3 [shape = 's32[2]{0}', space=sflag, size = 0x8, scoped, tag = 'scoped memory for tpu_custom_call.1']
    #allocation4 [shape = 'u8[8192]{0}', space=vmem, size = 0x2000, scoped, tag = 'output window, operand 1']
    #allocation5 [shape = 's32[2]{0}', space=sflag, size = 0x8, scoped, tag = 'scoped memory for tpu_custom_call.1']
    #allocation6 [shape = 'u8[8192]{0}', space=vmem, size = 0x2000, scoped, tag = 'output window, operand 2']
    %10 = vsyncpa [#allocation3], 0
    %s11 = scalar_lea.sflag [#allocation3], 1
    %12 = vsyncpa %s11, 0
    %13 = vsyncpa [#allocation5], 0
    %s14 = scalar_lea.sflag [#allocation5], 1
    %15 = vsyncpa %s14, 0
    loop: start=0, step=1, limit=4
    $region2: #{tpu_custom_call.1} parent=1 // loop_pre_header
      _
    $region3: #{tpu_custom_call.1} parent=1 // loop_header
      %s17 = sphi 0, %s21
      %p18 = scmp.ge.s32.totalorder %s17, 4
      %s24 = sphi 0, %s43
      %s25 = sphi 0, %s39
      %s26 = sphi 0, %s35
      %s27 = sphi 0, %s24
      %s28 = sphi 0, %s25
      %s29 = sphi 0, %s26
      %s30 = sphi 0, %s27
      %s31 = sphi 0, %s28
      %s32 = sphi 0, %s29
      %s48 = sphi 0, %s50
      %s51 = sphi 0, %s48
      %s52 = sphi 0, %s51
      %s68 = sphi 0, %s52
      %s76 = sphi 0, %s78
      %s79 = sphi 0, %s76
      %s80 = sphi 0, %s79
      %s96 = sphi 0, %s80
      %s104 = sphi 0, %s106
      %s107 = sphi 0, %s104
      %s108 = sphi 0, %s107
      %s124 = sphi 0, %s108
      %s132 = sphi 0, %s134
      %s135 = sphi 0, %s132
      %s136 = sphi 0, %s135
      %s152 = sphi 0, %s136
      %s160 = sphi 0, %s162
      %s163 = sphi 0, %s160
      %s164 = sphi 0, %s163
      %s180 = sphi 0, %s164
    $region4: #{tpu_custom_call.1} parent=1 // loop_header_branch
      %20 = sbr.rel (%p18) target = $region8
    $region5: #{tpu_custom_call.1} parent=1 // loop_body
      %s22 = ssub.s32 %s17, 1
      %s23 = ssub.s32 %s17, 2
      %s33 = sadd.s32 1, %s26
      %p34 = scmp.ge.s32.totalorder %s33, 1
      %s35 = scalar_select %p34, 0, %s33
      %s36 = sadd.s32 1, %s25
      %s37 = scalar_select %p34, %s36, %s25
      %p38 = scmp.ge.s32.totalorder %s37, 1
      %s39 = scalar_select %p38, 0, %s37
      %s40 = sadd.s32 1, %s24
      %s41 = scalar_select %p38, %s40, %s24
      %p42 = scmp.ge.s32.totalorder %s41, 2
      %s43 = scalar_select %p42, 0, %s41
      %s44 = ssub.s32 %s24, %s43
      %s45 = ssub.s32 %s26, %s35
      %s46 = sor.u32 %s44, %s45
      %p47 = scmp.eq.s32.totalorder %s46, 0
      %s49 = sadd.s32 %s48, 1
      %s50 = scalar_select %p47, %s48, %s49
      %p53 = pneg %p47
      %p54 = scmp.eq.s32.totalorder %s17, 1
      %p55 = por %p53, %p54
      %p56 = scmp.ne.s32.totalorder %s48, %s51
      %p57 = scmp.eq.s32.totalorder %s17, 0
      %p58 = por %p56, %p57
      %p59 = scmp.ne.s32.totalorder %s48, %s51
      %p60 = scmp.eq.s32.totalorder %s22, 1
      %p61 = por %p59, %p60
      %p62 = scmp.ne.s32.totalorder %s51, %s52
      %p63 = scmp.eq.s32.totalorder %s22, 0
      %p64 = por %p62, %p63
      %p65 = scmp.ne.s32.totalorder %s51, %s52
      %p66 = scmp.eq.s32.totalorder %s23, 1
      %p67 = por %p65, %p66
      %p69 = scmp.ne.s32.totalorder %s52, %s68
      %p70 = scmp.eq.s32.totalorder %s23, 0
      %p71 = por %p69, %p70
      %s72 = ssub.s32 %s26, %s35
      %s73 = ssub.s32 %s25, %s39
      %s74 = sor.u32 %s72, %s73
      %p75 = scmp.eq.s32.totalorder %s74, 0
      %s77 = sadd.s32 %s76, 1
      %s78 = scalar_select %p75, %s76, %s77
      %p81 = pneg %p75
      %p82 = scmp.eq.s32.totalorder %s17, 1
      %p83 = por %p81, %p82
      %p84 = scmp.ne.s32.totalorder %s76, %s79
      %p85 = scmp.eq.s32.totalorder %s17, 0
      %p86 = por %p84, %p85
      %p87 = scmp.ne.s32.totalorder %s76, %s79
      %p88 = scmp.eq.s32.totalorder %s22, 1
      %p89 = por %p87, %p88
      %p90 = scmp.ne.s32.totalorder %s79, %s80
      %p91 = scmp.eq.s32.totalorder %s22, 0
      %p92 = por %p90, %p91
      %p93 = scmp.ne.s32.totalorder %s79, %s80
      %p94 = scmp.eq.s32.totalorder %s23, 1
      %p95 = por %p93, %p94
      %p97 = scmp.ne.s32.totalorder %s80, %s96
      %p98 = scmp.eq.s32.totalorder %s23, 0
      %p99 = por %p97, %p98
      %s100 = ssub.s32 %s24, %s43
      %s101 = ssub.s32 %s25, %s39
      %s102 = sor.u32 %s100, %s101
      %p103 = scmp.eq.s32.totalorder %s102, 0
      %s105 = sadd.s32 %s104, 1
      %s106 = scalar_select %p103, %s104, %s105
      %p109 = pneg %p103
      %p110 = scmp.eq.s32.totalorder %s17, 1
      %p111 = por %p109, %p110
      %p112 = scmp.ne.s32.totalorder %s104, %s107
      %p113 = scmp.eq.s32.totalorder %s17, 0
      %p114 = por %p112, %p113
      %p115 = scmp.ne.s32.totalorder %s104, %s107
      %p116 = scmp.eq.s32.totalorder %s22, 1
      %p117 = por %p115, %p116
      %p118 = scmp.ne.s32.totalorder %s107, %s108
      %p119 = scmp.eq.s32.totalorder %s22, 0
      %p120 = por %p118, %p119
      %p121 = scmp.ne.s32.totalorder %s107, %s108
      %p122 = scmp.eq.s32.totalorder %s23, 1
      %p123 = por %p121, %p122
      %p125 = scmp.ne.s32.totalorder %s108, %s124
      %p126 = scmp.eq.s32.totalorder %s23, 0
      %p127 = por %p125, %p126
      %s128 = ssub.s32 %s24, %s43
      %s129 = ssub.s32 %s25, %s39
      %s130 = sor.u32 %s128, %s129
      %p131 = scmp.eq.s32.totalorder %s130, 0
      %s133 = sadd.s32 %s132, 1
      %s134 = scalar_select %p131, %s132, %s133
      %p137 = pneg %p131
      %p138 = scmp.eq.s32.totalorder %s17, 1
      %p139 = por %p137, %p138
      %p140 = scmp.ne.s32.totalorder %s132, %s135
      %p141 = scmp.eq.s32.totalorder %s17, 0
      %p142 = por %p140, %p141
      %p143 = scmp.ne.s32.totalorder %s132, %s135
      %p144 = scmp.eq.s32.totalorder %s22, 1
      %p145 = por %p143, %p144
      %p146 = scmp.ne.s32.totalorder %s135, %s136
      %p147 = scmp.eq.s32.totalorder %s22, 0
      %p148 = por %p146, %p147
      %p149 = scmp.ne.s32.totalorder %s135, %s136
      %p150 = scmp.eq.s32.totalorder %s23, 1
      %p151 = por %p149, %p150
      %p153 = scmp.ne.s32.totalorder %s136, %s152
      %p154 = scmp.eq.s32.totalorder %s23, 0
      %p155 = por %p153, %p154
      %s156 = ssub.s32 %s24, %s43
      %s157 = ssub.s32 %s25, %s39
      %s158 = sor.u32 %s156, %s157
      %p159 = scmp.eq.s32.totalorder %s158, 0
      %s161 = sadd.s32 %s160, 1
      %s162 = scalar_select %p159, %s160, %s161
      %p165 = pneg %p159
      %p166 = scmp.eq.s32.totalorder %s17, 1
      %p167 = por %p165, %p166
      %p168 = scmp.ne.s32.totalorder %s160, %s163
      %p169 = scmp.eq.s32.totalorder %s17, 0
      %p170 = por %p168, %p169
      %p171 = scmp.ne.s32.totalorder %s160, %s163
      %p172 = scmp.eq.s32.totalorder %s22, 1
      %p173 = por %p171, %p172
      %p174 = scmp.ne.s32.totalorder %s163, %s164
      %p175 = scmp.eq.s32.totalorder %s22, 0
      %p176 = por %p174, %p175
      %p177 = scmp.ne.s32.totalorder %s163, %s164
      %p178 = scmp.eq.s32.totalorder %s23, 1
      %p179 = por %p177, %p178
      %p181 = scmp.ne.s32.totalorder %s164, %s180
      %p182 = scmp.eq.s32.totalorder %s23, 0
      %p183 = por %p181, %p182
      %p184 = scmp.le.s32.totalorder 1, %s17
      %p185 = scmp.lt.s32.totalorder %s17, 3
      %p186 = pnand %p184, %p185
      %p187 = pneg %p186
      // Predicated region
      $region9: #{tpu_custom_call.1} parent=5 // pred_check
        _
      $region10: #{tpu_custom_call.1} parent=5 // pred_check_branch
        %189 = sbr.rel (%p186) target = $region12
      $region11: #{tpu_custom_call.1} parent=5 // pred_region
        %s190 = ssub.s32 %s17, 1
        // Predicated region
        $region13: #{tpu_custom_call.1} parent=11 // pred_check
          %p191 = pneg %p92
        $region14: #{tpu_custom_call.1} parent=11 // pred_check_branch
          %193 = sbr.rel (%p191) target = $region16
        $region15: #{tpu_custom_call.1} parent=11 // pred_region
          %s194 = smul.u32 5, %s29
          %p195 = scmp.lt.s32.totalorder %s194, 4
          %s196 = scalar_select %p195, %s194, 4
          %p197 = scmp.lt.s32.totalorder %s28, 0
          %s198 = scalar_select %p197, %s28, 0
          %s199 = sadd.s32 %s198, %s196
          %s200 = smul.addr %s199, 4
          %s201 = scalar_lea.vmem %s1, %s200
          %s202 = smul.u32 5, %s29
        $region16: #{tpu_custom_call.1} parent=11 // pred_fallthru
          _
      $region12: #{tpu_custom_call.1} parent=5 // pred_fallthru
        _
      %p203 = scmp.lt.s32.totalorder %s17, 2
      // Predicated region
      $region17: #{tpu_custom_call.1} parent=5 // pred_check
        %p204 = pneg %p203
      $region18: #{tpu_custom_call.1} parent=5 // pred_check_branch
        %206 = sbr.rel (%p204) target = $region20
      $region19: #{tpu_custom_call.1} parent=5 // pred_region
        // Predicated region
        $region21: #{tpu_custom_call.1} parent=19 // pred_check
          %p207 = pneg %p58
        $region22: #{tpu_custom_call.1} parent=19 // pred_check_branch
          %209 = sbr.rel (%p207) target = $region24
        $region23: #{tpu_custom_call.1} parent=19 // pred_region
          %s210 = smul.u32 32, %s24
          %p211 = scmp.lt.s32.totalorder %s210, 63
          %s212 = scalar_select %p211, %s210, 63
          %p213 = scmp.lt.s32.totalorder %s26, 0
          %s214 = scalar_select %p213, %s26, 0
          %s215 = sadd.s32 %s214, %s212
          %s216 = smul.addr %s215, 4
          %s217 = scalar_lea.vmem %s0, %s216
          %s218 = smul.u32 32, %s24
        $region24: #{tpu_custom_call.1} parent=19 // pred_fallthru
          _
      $region20: #{tpu_custom_call.1} parent=5 // pred_fallthru
        _
      %p219 = scmp.le.s32.totalorder 1, %s17
      %p220 = scmp.lt.s32.totalorder %s17, 3
      %p221 = pnand %p219, %p220
      %p222 = pneg %p221
      // Predicated region
      $region25: #{tpu_custom_call.1} parent=5 // pred_check
        _
      $region26: #{tpu_custom_call.1} parent=5 // pred_check_branch
        %224 = sbr.rel (%p221) target = $region28
      $region27: #{tpu_custom_call.1} parent=5 // pred_region
        %s225 = ssub.s32 %s17, 1
        %s226 = smul.u32 32, %s27
        %p227 = scmp.lt.s32.totalorder %s226, 63
        %s228 = scalar_select %p227, %s226, 63
        %p229 = scmp.lt.s32.totalorder %s29, 0
        %s230 = scalar_select %p229, %s29, 0
        %s231 = sadd.s32 %s230, %s228
        %s232 = smul.addr %s231, 4
        %s233 = scalar_lea.vmem %s0, %s232
        %p234 = pneg %p64
        %p235 = pneg %p61
        %s236 = smul.u32 5, %s29
        %p237 = scmp.lt.s32.totalorder %s236, 4
        %s238 = scalar_select %p237, %s236, 4
        %p239 = scmp.lt.s32.totalorder %s28, 0
        %s240 = scalar_select %p239, %s28, 0
        %s241 = sadd.s32 %s240, %s238
        %s242 = smul.addr %s241, 4
        %s243 = scalar_lea.vmem %s1, %s242
        %p244 = pneg %p92
        %p245 = pneg %p89
        %p246 = pneg %p120
        %p247 = pneg %p117
        %s248 = sand.u32 %s107, 1
        %s249 = scalar_lea.sflag [#allocation3], %s248
        %s250 = sand.u32 %s107, 1
        %s251 = smul.addr %s250, 128
        %s252 = scalar_lea.vmem [#allocation2], %s251
        %p253 = pneg %p148
        %p254 = pneg %p145
        %s255 = sand.u32 %s22, 1
        %s256 = scalar_lea.sflag [#allocation5], %s255
        %s257 = sand.u32 %s135, 1
        %s258 = smul.addr %s257, 8
        %s259 = scalar_lea.vmem [#allocation4], %s258
        %p260 = pneg %p176
        %p261 = pneg %p173
        %s262 = sand.u32 %s22, 1
        %s263 = scalar_lea.sflag [#allocation5], %s262
        %s264 = sand.u32 %s163, 1
        %s265 = smul.addr %s264, 8
        %s266 = scalar_lea.vmem [#allocation6], %s265
        %s267 = smul.u32 32, %s27
        %p268 = scmp.lt.s32.totalorder %s267, 63
        %s269 = scalar_select %p268, %s267, 63
        %p270 = scmp.lt.s32.totalorder %s29, 0
        %s271 = scalar_select %p270, %s29, 0
        %s272 = sadd.s32 %s271, %s269
        %s273 = smul.addr %s272, 4
        %s274 = scalar_lea.vmem %s0, %s273
        %s275 = smul.u32 32, %s27
        %s276 = smul.u32 5, %s29
        %p277 = scmp.lt.s32.totalorder %s276, 4
        %s278 = scalar_select %p277, %s276, 4
        %p279 = scmp.lt.s32.totalorder %s28, 0
        %s280 = scalar_select %p279, %s28, 0
        %s281 = sadd.s32 %s280, %s278
        %s282 = smul.addr %s281, 4
        %s283 = scalar_lea.vmem %s1, %s282
        %s284 = smul.u32 5, %s29
        %s285 = smul.u32 32, %s27
        %v287 = vld [vmem:[%s274] sm:$0xf]
        %v288 = vld [vmem:[%s274 + $0x4] sm:$0xf]
        %v289 = vld [vmem:[%s274 + $0x8] sm:$0xf]
        %v290 = vld [vmem:[%s274 + $0xc] sm:$0xf]
        %v291 = vld [vmem:[%s274 + $0x10] sm:$0xf]
        %v292 = vld [vmem:[%s274 + $0x14] sm:$0xf]
        %v293 = vld [vmem:[%s274 + $0x18] sm:$0xf]
        %v294 = vld [vmem:[%s274 + $0x1c] sm:$0xf]
        %v295 = vld [vmem:[%s274 + $0x20] sm:$0xf]
        %v296 = vld [vmem:[%s274 + $0x24] sm:$0xf]
        %v297 = vld [vmem:[%s274 + $0x28] sm:$0xf]
        %v298 = vld [vmem:[%s274 + $0x2c] sm:$0xf]
        %v299 = vld [vmem:[%s274 + $0x30] sm:$0xf]
        %v300 = vld [vmem:[%s274 + $0x34] sm:$0xf]
        %v301 = vld [vmem:[%s274 + $0x38] sm:$0xf]
        %v302 = vld [vmem:[%s274 + $0x3c] sm:$0xf]
        %v303 = vld [vmem:[%s274 + $0x40] sm:$0xf]
        %v304 = vld [vmem:[%s274 + $0x44] sm:$0xf]
        %v305 = vld [vmem:[%s274 + $0x48] sm:$0xf]
        %v306 = vld [vmem:[%s274 + $0x4c] sm:$0xf]
        %v307 = vld [vmem:[%s274 + $0x50] sm:$0xf]
        %v308 = vld [vmem:[%s274 + $0x54] sm:$0xf]
        %v309 = vld [vmem:[%s274 + $0x58] sm:$0xf]
        %v310 = vld [vmem:[%s274 + $0x5c] sm:$0xf]
        %v311 = vld [vmem:[%s274 + $0x60] sm:$0xf]
        %v312 = vld [vmem:[%s274 + $0x64] sm:$0xf]
        %v313 = vld [vmem:[%s274 + $0x68] sm:$0xf]
        %v314 = vld [vmem:[%s274 + $0x6c] sm:$0xf]
        %v315 = vld [vmem:[%s274 + $0x70] sm:$0xf]
        %v316 = vld [vmem:[%s274 + $0x74] sm:$0xf]
        %v317 = vld [vmem:[%s274 + $0x78] sm:$0xf]
        %v318 = vld [vmem:[%s274 + $0x7c] sm:$0xf]
        %v319 = vld [vmem:[%s283] sm:$0xf]
        %v320 = vld [vmem:[%s283 + $0x4] sm:$0xf]
        %v321 = vld [vmem:[%s283 + $0x8] sm:$0xf]
        %v322 = vld [vmem:[%s283 + $0xc] sm:$0xf]
        %v323 = vld [vmem:[%s283 + $0x10] sm:$0x3]
        %v356 = vunpack.c.l.b16 %v287
        %v357 = vunpack.c.l.b16 %v288
        %v358 = vunpack.c.l.b16 %v289
        %v359 = vunpack.c.l.b16 %v290
        %v360 = vunpack.c.l.b16 %v291
        %v361 = vunpack.c.l.b16 %v292
        %v362 = vunpack.c.l.b16 %v293
        %v363 = vunpack.c.l.b16 %v294
        %v364 = vunpack.c.l.b16 %v295
        %v365 = vunpack.c.l.b16 %v296
        %v366 = vunpack.c.l.b16 %v297
        %v367 = vunpack.c.l.b16 %v298
        %v368 = vunpack.c.l.b16 %v299
        %v369 = vunpack.c.l.b16 %v300
        %v370 = vunpack.c.l.b16 %v301
        %v371 = vunpack.c.l.b16 %v302
        %v372 = vunpack.c.l.b16 %v303
        %v373 = vunpack.c.l.b16 %v304
        %v374 = vunpack.c.l.b16 %v305
        %v375 = vunpack.c.l.b16 %v306
        %v376 = vunpack.c.l.b16 %v307
        %v377 = vunpack.c.l.b16 %v308
        %v378 = vunpack.c.l.b16 %v309
        %v379 = vunpack.c.l.b16 %v310
        %v380 = vunpack.c.l.b16 %v311
        %v381 = vunpack.c.l.b16 %v312
        %v382 = vunpack.c.l.b16 %v313
        %v383 = vunpack.c.l.b16 %v314
        %v384 = vunpack.c.l.b16 %v315
        %v385 = vunpack.c.l.b16 %v316
        %v386 = vunpack.c.l.b16 %v317
        %v387 = vunpack.c.l.b16 %v318
        %v388 = vpack.c.b16 %v357, %v356
        %v389 = vpack.c.b16 %v359, %v358
        %v390 = vpack.c.b16 %v361, %v360
        %v391 = vpack.c.b16 %v363, %v362
        %v392 = vpack.c.b16 %v365, %v364
        %v393 = vpack.c.b16 %v367, %v366
        %v394 = vpack.c.b16 %v369, %v368
        %v395 = vpack.c.b16 %v371, %v370
        %v396 = vpack.c.b16 %v373, %v372
        %v397 = vpack.c.b16 %v375, %v374
        %v398 = vpack.c.b16 %v377, %v376
        %v399 = vpack.c.b16 %v379, %v378
        %v400 = vpack.c.b16 %v381, %v380
        %v401 = vpack.c.b16 %v383, %v382
        %v402 = vpack.c.b16 %v385, %v384
        %v403 = vpack.c.b16 %v387, %v386
        %v409 = vunpack.c.l.b16 %v319
        %v410 = vunpack.c.l.b16 %v320
        %v411 = vunpack.c.l.b16 %v321
        %v412 = vunpack.c.l.b16 %v322
        %v413 = vunpack.c.l.b16 %v323
        %v414 = vpack.c.b16 %v410, %v409
        %v415 = vpack.c.b16 %v412, %v411
        %v416 = vpack.c.b16 %v413, %v413
        %vm419 = vcmask 293888
        %v421 = vsel %vm419, %v388, 0
        %v424 = vsel %vm419, %v389, 0
        %v427 = vsel %vm419, %v390, 0
        %v430 = vsel %vm419, %v391, 0
        %v433 = vsel %vm419, %v392, 0
        %v436 = vsel %vm419, %v393, 0
        %v439 = vsel %vm419, %v394, 0
        %v442 = vsel %vm419, %v395, 0
        %v445 = vsel %vm419, %v396, 0
        %v448 = vsel %vm419, %v397, 0
        %v451 = vsel %vm419, %v398, 0
        %v454 = vsel %vm419, %v399, 0
        %v457 = vsel %vm419, %v400, 0
        %v460 = vsel %vm419, %v401, 0
        %v463 = vsel %vm419, %v402, 0
        %v466 = vsel %vm419, %v403, 0
        %vm468 = vcmask 1041408
        %v470 = vsel %vm468, %v416, 0
        %472 = vmatprep.subr.bf16.mxu0 0
        %473 = vmatpush1.bf16.msra.mxu0 %v414
        %474 = vmatprep.subr.bf16.mxu0 0
        %475 = vmatpush1.bf16.msra.mxu0 %v415
        %476 = vmatprep.subr.bf16.mxu0 0
        %477 = vmatpush1.bf16.msra.mxu0 %v470
        %478 = vmatprep.subr.bf16.mxu0 0
        %479 = vmatpush1.bf16.msra.mxu0 0
        %480 = vmatprep.subr.bf16.mxu0 0
        %481 = vmatpush1.bf16.msra.mxu0 0
        %482 = vmatprep.subr.bf16.mxu0 0
        %483 = vmatpush1.bf16.msra.mxu0 0
        %484 = vmatprep.subr.bf16.mxu0 0
        %485 = vmatpush1.bf16.msra.mxu0 0
        %486 = vmatprep.subr.bf16.mxu0 0
        %487 = vmatpush1.bf16.msra.mxu0 0
        %488 = vmatprep.subr.bf16.mxu0 0
        %489 = vmatpush1.bf16.msra.mxu0 0
        %490 = vmatprep.subr.bf16.mxu0 0
        %491 = vmatpush1.bf16.msra.mxu0 0
        %492 = vmatprep.subr.bf16.mxu0 0
        %493 = vmatpush1.bf16.msra.mxu0 0
        %494 = vmatprep.subr.bf16.mxu0 0
        %495 = vmatpush1.bf16.msra.mxu0 0
        %496 = vmatprep.subr.bf16.mxu0 0
        %497 = vmatpush1.bf16.msra.mxu0 0
        %498 = vmatprep.subr.bf16.mxu0 0
        %499 = vmatpush1.bf16.msra.mxu0 0
        %500 = vmatprep.subr.bf16.mxu0 0
        %501 = vmatpush1.bf16.msra.mxu0 0
        %502 = vmatprep.subr.bf16.mxu0 0
        %503 = vmatpush1.bf16.msra.mxu0 0
        %504 = vmatprep.mubr.bf16.mxu0 0
        %505 = vmatmul.mubr.bf16.gmra.mrb[0].mxu0 %v421
        %v506 = vpop.f32.mrb[0].mxu0
        %v507 = vadd.f32 0.0, %v506
        %v508 = vpop.f32.mrb[0].mxu0
        %v509 = vpop.f32.mrb[0].mxu0
        %v510 = vadd.f32 0.0, %v509
        %v511 = vpop.f32.mrb[0].mxu0
        %512 = vmatprep.mubr.bf16.mxu0 0
        %513 = vmatmul.mubr.bf16.gmra.mrb[0].mxu0 %v424
        %v514 = vpop.f32.mrb[0].mxu0
        %v515 = vadd.f32 0.0, %v514
        %v516 = vpop.f32.mrb[0].mxu0
        %v517 = vpop.f32.mrb[0].mxu0
        %v518 = vadd.f32 0.0, %v517
        %v519 = vpop.f32.mrb[0].mxu0
        %520 = vmatprep.mubr.bf16.mxu0 0
        %521 = vmatmul.mubr.bf16.gmra.mrb[0].mxu0 %v427
        %v522 = vpop.f32.mrb[0].mxu0
        %v523 = vadd.f32 0.0, %v522
        %v524 = vpop.f32.mrb[0].mxu0
        %v525 = vpop.f32.mrb[0].mxu0
        %v526 = vadd.f32 0.0, %v525
        %v527 = vpop.f32.mrb[0].mxu0
        %528 = vmatprep.mubr.bf16.mxu0 0
        %529 = vmatmul.mubr.bf16.gmra.mrb[0].mxu0 %v430
        %v530 = vpop.f32.mrb[0].mxu0
        %v531 = vadd.f32 0.0, %v530
        %v532 = vpop.f32.mrb[0].mxu0
        %v533 = vpop.f32.mrb[0].mxu0
        %v534 = vadd.f32 0.0, %v533
        %v535 = vpop.f32.mrb[0].mxu0
        %536 = vmatprep.mubr.bf16.mxu0 0
        %537 = vmatmul.mubr.bf16.gmra.mrb[0].mxu0 %v433
        %v538 = vpop.f32.mrb[0].mxu0
        %v539 = vadd.f32 0.0, %v538
        %v540 = vpop.f32.mrb[0].mxu0
        %v541 = vpop.f32.mrb[0].mxu0
        %v542 = vadd.f32 0.0, %v541
        %v543 = vpop.f32.mrb[0].mxu0
        %544 = vmatprep.mubr.bf16.mxu0 0
        %545 = vmatmul.mubr.bf16.gmra.mrb[0].mxu0 %v436
        %v546 = vpop.f32.mrb[0].mxu0
        %v547 = vadd.f32 0.0, %v546
        %v548 = vpop.f32.mrb[0].mxu0
        %v549 = vpop.f32.mrb[0].mxu0
        %v550 = vadd.f32 0.0, %v549
        %v551 = vpop.f32.mrb[0].mxu0
        %552 = vmatprep.mubr.bf16.mxu0 0
        %553 = vmatmul.mubr.bf16.gmra.mrb[0].mxu0 %v439
        %v554 = vpop.f32.mrb[0].mxu0
        %v555 = vadd.f32 0.0, %v554
        %v556 = vpop.f32.mrb[0].mxu0
        %v557 = vpop.f32.mrb[0].mxu0
        %v558 = vadd.f32 0.0, %v557
        %v559 = vpop.f32.mrb[0].mxu0
        %560 = vmatprep.mubr.bf16.mxu0 0
        %561 = vmatmul.mubr.bf16.gmra.mrb[0].mxu0 %v442
        %v562 = vpop.f32.mrb[0].mxu0
        %v563 = vadd.f32 0.0, %v562
        %v564 = vpop.f32.mrb[0].mxu0
        %v565 = vpop.f32.mrb[0].mxu0
        %v566 = vadd.f32 0.0, %v565
        %v567 = vpop.f32.mrb[0].mxu0
        %568 = vmatprep.mubr.bf16.mxu0 0
        %569 = vmatmul.mubr.bf16.gmra.mrb[0].mxu0 %v445
        %v570 = vpop.f32.mrb[0].mxu0
        %v571 = vadd.f32 0.0, %v570
        %v572 = vpop.f32.mrb[0].mxu0
        %v573 = vpop.f32.mrb[0].mxu0
        %v574 = vadd.f32 0.0, %v573
        %v575 = vpop.f32.mrb[0].mxu0
        %576 = vmatprep.mubr.bf16.mxu0 0
        %577 = vmatmul.mubr.bf16.gmra.mrb[0].mxu0 %v448
        %v578 = vpop.f32.mrb[0].mxu0
        %v579 = vadd.f32 0.0, %v578
        %v580 = vpop.f32.mrb[0].mxu0
        %v581 = vpop.f32.mrb[0].mxu0
        %v582 = vadd.f32 0.0, %v581
        %v583 = vpop.f32.mrb[0].mxu0
        %584 = vmatprep.mubr.bf16.mxu0 0
        %585 = vmatmul.mubr.bf16.gmra.mrb[0].mxu0 %v451
        %v586 = vpop.f32.mrb[0].mxu0
        %v587 = vadd.f32 0.0, %v586
        %v588 = vpop.f32.mrb[0].mxu0
        %v589 = vpop.f32.mrb[0].mxu0
        %v590 = vadd.f32 0.0, %v589
        %v591 = vpop.f32.mrb[0].mxu0
        %592 = vmatprep.mubr.bf16.mxu0 0
        %593 = vmatmul.mubr.bf16.gmra.mrb[0].mxu0 %v454
        %v594 = vpop.f32.mrb[0].mxu0
        %v595 = vadd.f32 0.0, %v594
        %v596 = vpop.f32.mrb[0].mxu0
        %v597 = vpop.f32.mrb[0].mxu0
        %v598 = vadd.f32 0.0, %v597
        %v599 = vpop.f32.mrb[0].mxu0
        %600 = vmatprep.mubr.bf16.mxu0 0
        %601 = vmatmul.mubr.bf16.gmra.mrb[0].mxu0 %v457
        %v602 = vpop.f32.mrb[0].mxu0
        %v603 = vadd.f32 0.0, %v602
        %v604 = vpop.f32.mrb[0].mxu0
        %v605 = vpop.f32.mrb[0].mxu0
        %v606 = vadd.f32 0.0, %v605
        %v607 = vpop.f32.mrb[0].mxu0
        %608 = vmatprep.mubr.bf16.mxu0 0
        %609 = vmatmul.mubr.bf16.gmra.mrb[0].mxu0 %v460
        %v610 = vpop.f32.mrb[0].mxu0
        %v611 = vadd.f32 0.0, %v610
        %v612 = vpop.f32.mrb[0].mxu0
        %v613 = vpop.f32.mrb[0].mxu0
        %v614 = vadd.f32 0.0, %v613
        %v615 = vpop.f32.mrb[0].mxu0
        %616 = vmatprep.mubr.bf16.mxu0 0
        %617 = vmatmul.mubr.bf16.gmra.mrb[0].mxu0 %v463
        %v618 = vpop.f32.mrb[0].mxu0
        %v619 = vadd.f32 0.0, %v618
        %v620 = vpop.f32.mrb[0].mxu0
        %v621 = vpop.f32.mrb[0].mxu0
        %v622 = vadd.f32 0.0, %v621
        %v623 = vpop.f32.mrb[0].mxu0
        %624 = vmatprep.mubr.bf16.mxu0 0
        %625 = vmatmul.mubr.bf16.gmra.mrb[0].mxu0 %v466
        %v626 = vpop.f32.mrb[0].mxu0
        %v627 = vadd.f32 0.0, %v626
        %v628 = vpop.f32.mrb[0].mxu0
        %v629 = vpop.f32.mrb[0].mxu0
        %v630 = vadd.f32 0.0, %v629
        %v631 = vpop.f32.mrb[0].mxu0
        %632 = vdwg.mxu0
        %v633 = vpack.c.bf16 %v510, %v507
        %v634 = vpack.c.bf16 %v518, %v515
        %v635 = vpack.c.bf16 %v526, %v523
        %v636 = vpack.c.bf16 %v534, %v531
        %v637 = vpack.c.bf16 %v542, %v539
        %v638 = vpack.c.bf16 %v550, %v547
        %v639 = vpack.c.bf16 %v558, %v555
        %v640 = vpack.c.bf16 %v566, %v563
        %v641 = vpack.c.bf16 %v574, %v571
        %v642 = vpack.c.bf16 %v582, %v579
        %v643 = vpack.c.bf16 %v590, %v587
        %v644 = vpack.c.bf16 %v598, %v595
        %v645 = vpack.c.bf16 %v606, %v603
        %v646 = vpack.c.bf16 %v614, %v611
        %v647 = vpack.c.bf16 %v622, %v619
        %v648 = vpack.c.bf16 %v630, %v627
        %v665 = vunpack.c.l.b16 %v633
        %v666 = vunpack.c.h.b16 %v633
        %v667 = vunpack.c.l.b16 %v634
        %v668 = vunpack.c.h.b16 %v634
        %v669 = vunpack.c.l.b16 %v635
        %v670 = vunpack.c.h.b16 %v635
        %v671 = vunpack.c.l.b16 %v636
        %v672 = vunpack.c.h.b16 %v636
        %v673 = vunpack.c.l.b16 %v637
        %v674 = vunpack.c.h.b16 %v637
        %v675 = vunpack.c.l.b16 %v638
        %v676 = vunpack.c.h.b16 %v638
        %v677 = vunpack.c.l.b16 %v639
        %v678 = vunpack.c.h.b16 %v639
        %v679 = vunpack.c.l.b16 %v640
        %v680 = vunpack.c.h.b16 %v640
        %v681 = vunpack.c.l.b16 %v641
        %v682 = vunpack.c.h.b16 %v641
        %v683 = vunpack.c.l.b16 %v642
        %v684 = vunpack.c.h.b16 %v642
        %v685 = vunpack.c.l.b16 %v643
        %v686 = vunpack.c.h.b16 %v643
        %v687 = vunpack.c.l.b16 %v644
        %v688 = vunpack.c.h.b16 %v644
        %v689 = vunpack.c.l.b16 %v645
        %v690 = vunpack.c.h.b16 %v645
        %v691 = vunpack.c.l.b16 %v646
        %v692 = vunpack.c.h.b16 %v646
        %v693 = vunpack.c.l.b16 %v647
        %v694 = vunpack.c.h.b16 %v647
        %v695 = vunpack.c.l.b16 %v648
        %v696 = vunpack.c.h.b16 %v648
        %v697 = vpack.c.b16 %v665, %v665
        %v698 = vpack.c.b16 %v666, %v666
        %v699 = vpack.c.b16 %v667, %v667
        %v700 = vpack.c.b16 %v668, %v668
        %v701 = vpack.c.b16 %v669, %v669
        %v702 = vpack.c.b16 %v670, %v670
        %v703 = vpack.c.b16 %v671, %v671
        %v704 = vpack.c.b16 %v672, %v672
        %v705 = vpack.c.b16 %v673, %v673
        %v706 = vpack.c.b16 %v674, %v674
        %v707 = vpack.c.b16 %v675, %v675
        %v708 = vpack.c.b16 %v676, %v676
        %v709 = vpack.c.b16 %v677, %v677
        %v710 = vpack.c.b16 %v678, %v678
        %v711 = vpack.c.b16 %v679, %v679
        %v712 = vpack.c.b16 %v680, %v680
        %v713 = vpack.c.b16 %v681, %v681
        %v714 = vpack.c.b16 %v682, %v682
        %v715 = vpack.c.b16 %v683, %v683
        %v716 = vpack.c.b16 %v684, %v684
        %v717 = vpack.c.b16 %v685, %v685
        %v718 = vpack.c.b16 %v686, %v686
        %v719 = vpack.c.b16 %v687, %v687
        %v720 = vpack.c.b16 %v688, %v688
        %v721 = vpack.c.b16 %v689, %v689
        %v722 = vpack.c.b16 %v690, %v690
        %v723 = vpack.c.b16 %v691, %v691
        %v724 = vpack.c.b16 %v692, %v692
        %v725 = vpack.c.b16 %v693, %v693
        %v726 = vpack.c.b16 %v694, %v694
        %v727 = vpack.c.b16 %v695, %v695
        %v728 = vpack.c.b16 %v696, %v696
        %761 = vst [vmem:[%s252] sm:$0xf] %v697
        %762 = vst [vmem:[%s252 + $0x4] sm:$0xf] %v698
        %763 = vst [vmem:[%s252 + $0x8] sm:$0xf] %v699
        %764 = vst [vmem:[%s252 + $0xc] sm:$0xf] %v700
        %765 = vst [vmem:[%s252 + $0x10] sm:$0xf] %v701
        %766 = vst [vmem:[%s252 + $0x14] sm:$0xf] %v702
        %767 = vst [vmem:[%s252 + $0x18] sm:$0xf] %v703
        %768 = vst [vmem:[%s252 + $0x1c] sm:$0xf] %v704
        %769 = vst [vmem:[%s252 + $0x20] sm:$0xf] %v705
        %770 = vst [vmem:[%s252 + $0x24] sm:$0xf] %v706
        %771 = vst [vmem:[%s252 + $0x28] sm:$0xf] %v707
        %772 = vst [vmem:[%s252 + $0x2c] sm:$0xf] %v708
        %773 = vst [vmem:[%s252 + $0x30] sm:$0xf] %v709
        %774 = vst [vmem:[%s252 + $0x34] sm:$0xf] %v710
        %775 = vst [vmem:[%s252 + $0x38] sm:$0xf] %v711
        %776 = vst [vmem:[%s252 + $0x3c] sm:$0xf] %v712
        %777 = vst [vmem:[%s252 + $0x40] sm:$0xf] %v713
        %778 = vst [vmem:[%s252 + $0x44] sm:$0xf] %v714
        %779 = vst [vmem:[%s252 + $0x48] sm:$0xf] %v715
        %780 = vst [vmem:[%s252 + $0x4c] sm:$0xf] %v716
        %781 = vst [vmem:[%s252 + $0x50] sm:$0xf] %v717
        %782 = vst [vmem:[%s252 + $0x54] sm:$0xf] %v718
        %783 = vst [vmem:[%s252 + $0x58] sm:$0xf] %v719
        %784 = vst [vmem:[%s252 + $0x5c] sm:$0xf] %v720
        %785 = vst [vmem:[%s252 + $0x60] sm:$0xf] %v721
        %786 = vst [vmem:[%s252 + $0x64] sm:$0xf] %v722
        %787 = vst [vmem:[%s252 + $0x68] sm:$0xf] %v723
        %788 = vst [vmem:[%s252 + $0x6c] sm:$0xf] %v724
        %789 = vst [vmem:[%s252 + $0x70] sm:$0xf] %v725
        %790 = vst [vmem:[%s252 + $0x74] sm:$0xf] %v726
        %791 = vst [vmem:[%s252 + $0x78] sm:$0xf] %v727
        %792 = vst [vmem:[%s252 + $0x7c] sm:$0xf] %v728
        %v793 = vadd.f32 %v507, %v510
        %v794 = vadd.f32 %v793, %v515
        %v795 = vadd.f32 %v794, %v518
        %v796 = vadd.f32 %v795, %v523
        %v797 = vadd.f32 %v796, %v526
        %v798 = vadd.f32 %v797, %v531
        %v799 = vadd.f32 %v798, %v534
        %v800 = vadd.f32 %v799, %v539
        %v801 = vadd.f32 %v800, %v542
        %v802 = vadd.f32 %v801, %v547
        %v803 = vadd.f32 %v802, %v550
        %v804 = vadd.f32 %v803, %v555
        %v805 = vadd.f32 %v804, %v558
        %v806 = vadd.f32 %v805, %v563
        %v807 = vadd.f32 %v806, %v566
        %v808 = vadd.f32 %v807, %v571
        %v809 = vadd.f32 %v808, %v574
        %v810 = vadd.f32 %v809, %v579
        %v811 = vadd.f32 %v810, %v582
        %v812 = vadd.f32 %v811, %v587
        %v813 = vadd.f32 %v812, %v590
        %v814 = vadd.f32 %v813, %v595
        %v815 = vadd.f32 %v814, %v598
        %v816 = vadd.f32 %v815, %v603
        %v817 = vadd.f32 %v816, %v606
        %v818 = vadd.f32 %v817, %v611
        %v819 = vadd.f32 %v818, %v614
        %v820 = vadd.f32 %v819, %v619
        %v821 = vadd.f32 %v820, %v622
        %v822 = vadd.f32 %v821, %v627
        %v823 = vadd.f32 %v822, %v630
        %v824 = vrot.slane %v823, 4
        %v825 = vadd.f32 %v823, %v824
        %v826 = vrot.slane %v825, 2
        %v827 = vadd.f32 %v825, %v826
        %v828 = vrot.slane %v827, 1
        %v829 = vadd.f32 %v827, %v828
        %v830 = vmul.f32 %v507, %v507
        %v831 = vmul.f32 %v510, %v510
        %v832 = vmul.f32 %v515, %v515
        %v833 = vmul.f32 %v518, %v518
        %v834 = vmul.f32 %v523, %v523
        %v835 = vmul.f32 %v526, %v526
        %v836 = vmul.f32 %v531, %v531
        %v837 = vmul.f32 %v534, %v534
        %v838 = vmul.f32 %v539, %v539
        %v839 = vmul.f32 %v542, %v542
        %v840 = vmul.f32 %v547, %v547
        %v841 = vmul.f32 %v550, %v550
        %v842 = vmul.f32 %v555, %v555
        %v843 = vmul.f32 %v558, %v558
        %v844 = vmul.f32 %v563, %v563
        %v845 = vmul.f32 %v566, %v566
        %v846 = vmul.f32 %v571, %v571
        %v847 = vmul.f32 %v574, %v574
        %v848 = vmul.f32 %v579, %v579
        %v849 = vmul.f32 %v582, %v582
        %v850 = vmul.f32 %v587, %v587
        %v851 = vmul.f32 %v590, %v590
        %v852 = vmul.f32 %v595, %v595
        %v853 = vmul.f32 %v598, %v598
        %v854 = vmul.f32 %v603, %v603
        %v855 = vmul.f32 %v606, %v606
        %v856 = vmul.f32 %v611, %v611
        %v857 = vmul.f32 %v614, %v614
        %v858 = vmul.f32 %v619, %v619
        %v859 = vmul.f32 %v622, %v622
        %v860 = vmul.f32 %v627, %v627
        %v861 = vmul.f32 %v630, %v630
        %v862 = vadd.f32 %v830, %v831
        %v863 = vadd.f32 %v862, %v832
        %v864 = vadd.f32 %v863, %v833
        %v865 = vadd.f32 %v864, %v834
        %v866 = vadd.f32 %v865, %v835
        %v867 = vadd.f32 %v866, %v836
        %v868 = vadd.f32 %v867, %v837
        %v869 = vadd.f32 %v868, %v838
        %v870 = vadd.f32 %v869, %v839
        %v871 = vadd.f32 %v870, %v840
        %v872 = vadd.f32 %v871, %v841
        %v873 = vadd.f32 %v872, %v842
        %v874 = vadd.f32 %v873, %v843
        %v875 = vadd.f32 %v874, %v844
        %v876 = vadd.f32 %v875, %v845
        %v877 = vadd.f32 %v876, %v846
        %v878 = vadd.f32 %v877, %v847
        %v879 = vadd.f32 %v878, %v848
        %v880 = vadd.f32 %v879, %v849
        %v881 = vadd.f32 %v880, %v850
        %v882 = vadd.f32 %v881, %v851
        %v883 = vadd.f32 %v882, %v852
        %v884 = vadd.f32 %v883, %v853
        %v885 = vadd.f32 %v884, %v854
        %v886 = vadd.f32 %v885, %v855
        %v887 = vadd.f32 %v886, %v856
        %v888 = vadd.f32 %v887, %v857
        %v889 = vadd.f32 %v888, %v858
        %v890 = vadd.f32 %v889, %v859
        %v891 = vadd.f32 %v890, %v860
        %v892 = vadd.f32 %v891, %v861
        %v893 = vrot.slane %v892, 4
        %v894 = vadd.f32 %v892, %v893
        %v895 = vrot.slane %v894, 2
        %v896 = vadd.f32 %v894, %v895
        %v897 = vrot.slane %v896, 1
        %v898 = vadd.f32 %v896, %v897
        %899 = vst [vmem:[%s259] sm:$0xff] %v829
        %900 = vst [vmem:[%s266] sm:$0xff] %v898
        %s901 = sand.u32 %s107, 1
        %s902 = scalar_lea.sflag [#allocation3], %s901
        %s903 = sand.u32 %s107, 1
        %s904 = smul.addr %s903, 128
        %s905 = scalar_lea.vmem [#allocation2], %s904
        %s906 = sand.u32 %s22, 1
        %s907 = scalar_lea.sflag [#allocation5], %s906
        %s908 = sand.u32 %s135, 1
        %s909 = smul.addr %s908, 8
        %s910 = scalar_lea.vmem [#allocation4], %s909
        %s911 = sand.u32 %s22, 1
        %s912 = scalar_lea.sflag [#allocation5], %s911
        %s913 = sand.u32 %s163, 1
        %s914 = smul.addr %s913, 8
        %s915 = scalar_lea.vmem [#allocation6], %s914
        // Predicated region
        $region29: #{tpu_custom_call.1} parent=27 // pred_check
          %p916 = pneg %p117
        $region30: #{tpu_custom_call.1} parent=27 // pred_check_branch
          %918 = sbr.rel (%p916) target = $region32
        $region31: #{tpu_custom_call.1} parent=27 // pred_region
          %s919 = smul.u32 32, %s27
          %s921 = ssub.s32 2048, 2048
          %922 = vsyncadd %s902, %s921
          %s923 = sadd.s32 %s28, %s919
          %s924 = smul.addr %s923, 64
          %s925 = scalar_lea.hbm %s2, %s924
          %s926 = sshll.u32 %s905, 4
          %s927 = int_to_ptr.vmem [resolvable:$true] %s926
          %932 = dma.vmem_to_hbm [thread:$0]  %s927, 2048, %s925, %s902, 64, 64, 4
        $region32: #{tpu_custom_call.1} parent=27 // pred_fallthru
          _
        // Predicated region
        $region33: #{tpu_custom_call.1} parent=27 // pred_check
          %p933 = pneg %p145
        $region34: #{tpu_custom_call.1} parent=27 // pred_check_branch
          %935 = sbr.rel (%p933) target = $region36
        $region35: #{tpu_custom_call.1} parent=27 // pred_region
          %s937 = ssub.s32 128, 128
          %938 = vsyncadd %s907, %s937
          %s939 = sadd.s32 %s28, %s27
          %s940 = smul.addr %s939, 128
          %s941 = scalar_lea.hbm %s3, %s940
          %s943 = sshll.u32 %s910, 4
          %s944 = int_to_ptr.vmem [resolvable:$true] %s943
          %946 = dma.vmem_to_hbm [thread:$0]  %s944, 128, %s941, %s907
        $region36: #{tpu_custom_call.1} parent=27 // pred_fallthru
          _
        // Predicated region
        $region37: #{tpu_custom_call.1} parent=27 // pred_check
          %p947 = pneg %p173
        $region38: #{tpu_custom_call.1} parent=27 // pred_check_branch
          %949 = sbr.rel (%p947) target = $region40
        $region39: #{tpu_custom_call.1} parent=27 // pred_region
          %s951 = ssub.s32 128, 128
          %952 = vsyncadd %s912, %s951
          %s953 = sadd.s32 %s28, %s27
          %s954 = smul.addr %s953, 128
          %s955 = scalar_lea.hbm %s4, %s954
          %s957 = sshll.u32 %s915, 4
          %s958 = int_to_ptr.vmem [resolvable:$true] %s957
          %960 = dma.vmem_to_hbm [thread:$0]  %s958, 128, %s955, %s912
        $region40: #{tpu_custom_call.1} parent=27 // pred_fallthru
          _
      $region28: #{tpu_custom_call.1} parent=5 // pred_fallthru
        _
      %p961 = scmp.le.s32.totalorder 2, %s17
      // Predicated region
      $region41: #{tpu_custom_call.1} parent=5 // pred_check
        %p962 = pneg %p961
      $region42: #{tpu_custom_call.1} parent=5 // pred_check_branch
        %964 = sbr.rel (%p962) target = $region44
      $region43: #{tpu_custom_call.1} parent=5 // pred_region
        %s965 = ssub.s32 %s17, 2
        // Predicated region
        $region45: #{tpu_custom_call.1} parent=43 // pred_check
          %p966 = pneg %p123
        $region46: #{tpu_custom_call.1} parent=43 // pred_check_branch
          %968 = sbr.rel (%p966) target = $region48
        $region47: #{tpu_custom_call.1} parent=43 // pred_region
          %s969 = sand.u32 %s108, 1
          %s970 = scalar_lea.sflag [#allocation3], %s969
          %s971 = sand.u32 %s108, 1
          %s972 = smul.addr %s971, 128
          %s973 = scalar_lea.vmem [#allocation2], %s972
          %974 = dma.done %s970, 2048
        $region48: #{tpu_custom_call.1} parent=43 // pred_fallthru
          _
        // Predicated region
        $region49: #{tpu_custom_call.1} parent=43 // pred_check
          %p975 = pneg %p151
        $region50: #{tpu_custom_call.1} parent=43 // pred_check_branch
          %977 = sbr.rel (%p975) target = $region52
        $region51: #{tpu_custom_call.1} parent=43 // pred_region
          %s978 = sand.u32 %s23, 1
          %s979 = scalar_lea.sflag [#allocation5], %s978
          %s980 = sand.u32 %s136, 1
          %s981 = smul.addr %s980, 8
          %s982 = scalar_lea.vmem [#allocation4], %s981
          %983 = dma.done %s979, 128
        $region52: #{tpu_custom_call.1} parent=43 // pred_fallthru
          _
        // Predicated region
        $region53: #{tpu_custom_call.1} parent=43 // pred_check
          %p984 = pneg %p179
        $region54: #{tpu_custom_call.1} parent=43 // pred_check_branch
          %986 = sbr.rel (%p984) target = $region56
        $region55: #{tpu_custom_call.1} parent=43 // pred_region
          %s987 = sand.u32 %s23, 1
          %s988 = scalar_lea.sflag [#allocation5], %s987
          %s989 = sand.u32 %s164, 1
          %s990 = smul.addr %s989, 8
          %s991 = scalar_lea.vmem [#allocation6], %s990
          %992 = dma.done %s988, 128
        $region56: #{tpu_custom_call.1} parent=43 // pred_fallthru
          _
      $region44: #{tpu_custom_call.1} parent=5 // pred_fallthru
        _
    $region6: #{tpu_custom_call.1} parent=1 // loop_footer
      %s21 = sadd.s32 1, %s17
    $region7: #{tpu_custom_call.1} parent=1 // loop_footer_branch
      %16 = sbr.rel target = $region3
    $region8: #{tpu_custom_call.1} parent=1 // loop_exit
      _
    %993 = vsyncpa [#allocation3], 1
    %s994 = scalar_lea.sflag [#allocation3], 1
    %995 = vsyncpa %s994, 1
    %996 = vsyncpa [#allocation5], 1
    %s997 = scalar_lea.sflag [#allocation5], 1
    %998 = vsyncpa %s997, 1

</llo_original>
